<compile_context>
chip_gen: v7x
topology: tpu7x:2x2x1
jax: 0.10.0
libtpu: 0.0.40
codegen_flags: <defaults>
</compile_context>

<pallas_src>
import functools

import jax
import jax.numpy as jnp
from jax.experimental import pallas as pl
from jax.experimental.pallas import tpu as pltpu


def _sublane_multiple(dtype) -> int:
    """Minimum second-to-last block dim for a given dtype (sublane packing)."""
    itemsize = jnp.dtype(dtype).itemsize
    return {4: 8, 2: 16, 1: 32}.get(itemsize, 8)


@functools.lru_cache(maxsize=None)
def _block_and_vmem_config():
    """(target_block_bytes, vmem_limit_bytes) for the local TPU generation."""
    try:
        cap = int(pltpu.get_tpu_info().vmem_capacity_bytes)
    except Exception:
        cap = 64 << 20  # conservative: assume v7x-class per-core VMEM
    if cap <= 80 << 20:
        # v7x: 64 MiB VMEM per TensorCore, ~3.2 TB/s HBM -> bigger blocks to
        # amortize the ~0.35 us per-grid-step overhead; 4 buffers * 6 MiB = 24 MiB.
        return 6 << 20, 40 << 20
    # v5e / v6e: 128 MiB physical VMEM; 4 MiB blocks, explicit 32 MiB limit so
    # v5e's 16 MiB scoped default cannot OOM us.
    return 4 << 20, 32 << 20


def _make_cosine_kernel(w0: float):
    """Kernel closing over the (static, frozen-buffer) w0 value."""

    def kernel(x_ref, o_ref):
        # Compute in f32 (the PyTorch module's w0 buffer is float32), cast back.
        # TODO(synk): on v7x, a bf16 compute path could help only if a bundle
        # dump shows the cos polynomial saturating the VALU slot.
        x32 = x_ref[...].astype(jnp.float32)
        o_ref[...] = jnp.cos(x32 * w0).astype(o_ref.dtype)

    return kernel


def _pick_lanes(n: int, dtype):
    """Largest multiple-of-128 divisor of n (<= 8192), preferring row counts
    that are sublane-aligned. Returns None if n is not a multiple of 128."""
    if n % 128 != 0:
        return None
    min_sub = _sublane_multiple(dtype)
    divisors = [128 * k for k in range(1, 65) if n % (128 * k) == 0]
    clean = [d for d in divisors if (n // d) % min_sub == 0]
    return clean[-1] if clean else divisors[-1]


def _pick_block_rows(rows: int, lanes: int, dtype, target_block_bytes: int) -> int:
    min_sub = _sublane_multiple(dtype)
    itemsize = jnp.dtype(dtype).itemsize
    total_bytes = rows * lanes * itemsize

    max_rows = target_block_bytes // (lanes * itemsize)
    max_rows = max(min_sub, (max_rows // min_sub) * min_sub)

    # For tensors above ~2 MiB, force >= 2 grid steps so the "parallel" grid
    # axis can be split across both v7x TensorCores / megacore.
    if total_bytes > (2 << 20) and rows > min_sub:
        half_rows = ((rows + 1) // 2 + min_sub - 1) // min_sub * min_sub
        max_rows = min(max_rows, max(min_sub, half_rows))

    if rows <= max_rows:
        return rows  # full row extent — always a legal block dim
    # Prefer an exact divisor (no ragged final block); else accept masking.
    for br in range(max_rows, min_sub - 1, -min_sub):
        if rows % br == 0:
            return br
    return max_rows


def _pick_block_lanes(n: int, dtype, target_block_bytes: int) -> int:
    """Lane-block length for the ragged (1, n) view. A (1, L) block is
    sublane-padded to (8, L) in VMEM, so budget against 8x the data size."""
    itemsize = jnp.dtype(dtype).itemsize
    max_lanes = target_block_bytes // (8 * itemsize)
    max_lanes = max(128, (max_lanes // 128) * 128)
    if n <= max_lanes:
        return n  # full lane extent — always legal, no masking needed
    return max_lanes


def _pallas_cos(x2d, w0: float, block_shape, grid, index_map, vmem_limit_bytes):
    rows, lanes = x2d.shape
    n = rows * lanes
    itemsize = jnp.dtype(x2d.dtype).itemsize
    return pl.pallas_call(
        _make_cosine_kernel(w0),
        out_shape=jax.ShapeDtypeStruct((rows, lanes), x2d.dtype),
        grid=grid,
        in_specs=[pl.BlockSpec(block_shape, index_map)],
        out_specs=pl.BlockSpec(block_shape, index_map),
        compiler_params=pltpu.CompilerParams(
            dimension_semantics=("parallel",),
            vmem_limit_bytes=vmem_limit_bytes,
        ),
        cost_estimate=pl.CostEstimate(
            flops=2 * n,
            transcendentals=n,
            bytes_accessed=2 * n * itemsize,
        ),
    )(x2d)


def cosine(x, w0=1.0, *, target_block_bytes=None):
    """Apply y = cos(w0 * x) elementwise via a Pallas TPU kernel."""
    orig_shape = x.shape
    dtype = x.dtype
    n = x.size
    if n == 0:
        return x
    w0 = float(w0)

    auto_block, vmem_limit = _block_and_vmem_config()
    if target_block_bytes is None:
        target_block_bytes = auto_block

    lanes = _pick_lanes(n, dtype)
    if lanes is not None:
        # Exact lane-dense factorization: pure reshape, no pad / tail slice.
        rows = n // lanes
        x2d = x.reshape(rows, lanes)
        block_rows = _pick_block_rows(rows, lanes, dtype, target_block_bytes)
        grid = (pl.cdiv(rows, block_rows),)
        out2d = _pallas_cos(x2d, w0, (block_rows, lanes), grid,
                            lambda i: (i, 0), vmem_limit)
        return out2d.reshape(orig_shape)

    # Ragged: element count not a multiple of 128. View the raveled tensor as
    # (1, n) and block along the lane dim; Pallas masks the final partial
    # block, so there is no pad / tail-slice HBM round trip.
    x2d = x.reshape(1, n)
    block_lanes = _pick_block_lanes(n, dtype, target_block_bytes)
    grid = (pl.cdiv(n, block_lanes),)
    out2d = _pallas_cos(x2d, w0, (1, block_lanes), grid,
                        lambda i: (0, i), vmem_limit)
    return out2d.reshape(orig_shape)


if __name__ == "__main__":
    key = jax.random.PRNGKey(0)

    # NCHW input, matching the PyTorch convention.
    x = jax.random.normal(key, (2, 4, 16, 16), dtype=jnp.float32)
    w0 = 1.0  # matches Cosine() default buffer value
    y = jax.jit(lambda a: cosine(a, w0))(x)
    jax.block_until_ready(y)
    y_ref = jnp.cos(jnp.float32(w0) * x)
    assert y.shape == x.shape and y.dtype == x.dtype
    assert jnp.allclose(y, y_ref, atol=1e-6, rtol=1e-6)

    # Medium tensor (8 MiB): exercises the multi-step (>= 2 blocks) grid path.
    x1 = jax.random.normal(jax.random.PRNGKey(2), (8, 32, 64, 64), dtype=jnp.float32)
    y1 = jax.jit(lambda a: cosine(a, w0))(x1)
    jax.block_until_ready(y1)
    assert jnp.allclose(y1, jnp.cos(jnp.float32(w0) * x1), atol=1e-6, rtol=1e-6)

    # Ragged (non-multiple-of-128) path — no pad/slice, masked block — and w0 != 1.
    x2 = jax.random.normal(jax.random.PRNGKey(1), (3, 5, 7), dtype=jnp.float32)
    y2 = jax.jit(lambda a: cosine(a, 30.0))(x2)
    jax.block_until_ready(y2)
    assert y2.shape == x2.shape
    assert jnp.allclose(y2, jnp.cos(jnp.float32(30.0) * x2), atol=1e-5, rtol=1e-5)

    print("KERNEL_OK")
</pallas_src>

<mosaic_0001>
module attributes {stable_mosaic.version = 11 : i64} {
  func.func @kernel(%arg0: i32, %arg1: memref<8x256xf32, #tpu.memory_space<vmem>>, %arg2: memref<8x256xf32, #tpu.memory_space<vmem>>) attributes {dimension_semantics = [#tpu.dimension_semantics<parallel>], iteration_bounds = array<i64: 1>, scalar_prefetch = 0 : i64, scratch_operands = 0 : i64, tpu.core_type = #tpu.core_type<tc>, window_params = [{transform_indices = @transform_0, window_bounds = array<i64: 8, 256>}, {transform_indices = @transform_1, window_bounds = array<i64: 8, 256>}]} {
    %c0 = arith.constant 0 : index
    %c0_0 = arith.constant 0 : index
    %0 = vector.load %arg1[%c0, %c0_0] : memref<8x256xf32, #tpu.memory_space<vmem>>, vector<8x256xf32>
    %cst = arith.constant 1.000000e+00 : f32
    %1 = vector.broadcast %cst : f32 to vector<8x256xf32>
    %2 = arith.mulf %0, %1 : vector<8x256xf32>
    %3 = math.cos %2 : vector<8x256xf32>
    %c0_1 = arith.constant 0 : index
    %c0_2 = arith.constant 0 : index
    %4 = vector.load %arg2[%c0_1, %c0_2] : memref<8x256xf32, #tpu.memory_space<vmem>>, vector<8x256xf32>
    tpu.vector_store %arg2[%c0_1, %c0_2], %3 {strides = array<i32>} : memref<8x256xf32, #tpu.memory_space<vmem>>, vector<8x256xf32>,
    return
  }
  func.func @transform_0(%arg0: i32) -> (i32, i32) {
    %c0_i32 = arith.constant 0 : i32
    %c0_i32_0 = arith.constant 0 : i32
    return %arg0, %c0_i32 : i32, i32
  }
  func.func @transform_1(%arg0: i32) -> (i32, i32) {
    %c0_i32 = arith.constant 0 : i32
    %c0_i32_0 = arith.constant 0 : i32
    return %arg0, %c0_i32 : i32, i32
  }
}

</mosaic_0001>

<llo_original>
// kernel: _lambda_.1
$region0: #{_lambda_.1}
  #allocation0 [shape = 'u32[]', space=smem, size = 0x4, offset = 0x4, fixed_abs, tag = 'smem constant byte address 0x4 - core index']
  #allocation1 [shape = 'u32[144,128]{1,0:T(1,128)}', space=vmem, size = 0x12000, scoped, tag = 'internal scratch']
  %s0 = inlined_call_operand.vmem [shape: f32[8,256], index: 0, kind: input, shape index: {}]
  %s1 = inlined_call_operand.vmem [shape: f32[8,256], index: 1, kind: output, shape index: {}]
  %s2 = sld [smem:[#allocation0]]
  $region14: #{_lambda_.1} parent=0
    _
  %s4 = ssub.s32 1, %s2
  %s5 = scalar_select 0, %s4, %s2
  // Predicated region
  $region2: #{_lambda_.1} parent=0 // pred_check
    _
  $region3: #{_lambda_.1} parent=0 // pred_check_branch
    %7 = sbr.rel (0) target = $region5
  $region4: #{_lambda_.1} parent=0 // pred_region
    _
  $region5: #{_lambda_.1} parent=0 // pred_fallthru
    _
  %v8 = vld [vmem:[%s0] sm:$0xff]
  %v9 = vld [vmem:[%s0 + $0x8] sm:$0xff]
  %v10 = vand.u32 2147483647, %v8
  %vm11 = vcmp.le.f32.partialorder %v10, 0.7853982
  %vm12 = vcmp.lt.s32.totalorder %v8, 0
  %v13 = vand.u32 %v8, 2139095040
  %v14 = vshrl.u32 %v13, 23
  %v15 = vsub.s32 %v14, 127
  %v16 = vand.u32 2147483647, %v8
  %v17 = vand.u32 %v16, 8388607
  %v18 = vor.u32 %v17, 8388608
  %v19 = vsub.s32 0, %v18
  %v20 = vadd.s32 %v15, 1
  %vm21 = vcmp.gt.s32.totalorder %v20, 0
  %v22 = vsel %vm21, %v20, 0
  %v23 = vshrl.u32 %v22, 5
  %v24 = vand.u32 %v22, 31
  %v25 = vsub.s32 32, %v24
  %v26 = vshrl.u32 683565275, %v25
  %v27 = vshll.u32 683565275, %v24
  %v28 = vshrl.u32 2475754826, %v25
  %v29 = vor.u32 %v27, %v28
  %v30 = vshll.u32 2475754826, %v24
  %v31 = vshrl.u32 2131351028, %v25
  %v32 = vor.u32 %v30, %v31
  %v33 = vshll.u32 2131351028, %v24
  %v34 = vshrl.u32 2102212464, %v25
  %v35 = vor.u32 %v33, %v34
  %v36 = vshll.u32 2102212464, %v24
  %v37 = vshrl.u32 920167782, %v25
  %v38 = vor.u32 %v36, %v37
  %v39 = vshll.u32 920167782, %v24
  %v40 = vshrl.u32 1326507024, %v25
  %v41 = vor.u32 %v39, %v40
  %vm42 = vcmp.lt.s32.totalorder %v23, 1
  %vm43 = vcmp.lt.s32.totalorder %v23, 2
  %vm44 = vcmp.lt.s32.totalorder %v23, 3
  %vm45 = vcmp.lt.s32.totalorder %v23, 4
  %v46 = vsel %vm42, %v26, %v29
  %v47 = vsel %vm45, %v35, 2102212464
  %v48 = vsel %vm44, %v32, %v47
  %v49 = vsel %vm43, %v46, %v48
  %v50 = vsel %vm42, %v29, %v32
  %v51 = vsel %vm45, %v38, 920167782
  %v52 = vsel %vm44, %v35, %v51
  %v53 = vsel %vm43, %v50, %v52
  %v54 = vsel %vm42, %v32, %v35
  %v55 = vsel %vm45, %v41, 1326507024
  %v56 = vsel %vm44, %v38, %v55
  %v57 = vsel %vm43, %v54, %v56
  %v58 = vshll.u32 %v18, 8
  %v59 = vmul.u32.u64.compose %v58, %v57
  %v60 = vextract.low.u32 %v59
  %v61 = vextract.high.u32 %v59
  %v62 = vmul.u32.u64.compose %v58, %v53
  %v63 = vextract.low.u32 %v62
  %v64 = vextract.high.u32 %v62
  %v65 = vmul.u32 %v58, %v49
  %v66 = vadd.s32 %v61, %v63
  %vm67 = vc.u32 %v61, %v63
  %v68 = vadd.s32 %v64, 1
  %v69 = vsel %vm67, %v68, %v64
  %v70 = vadd.s32 %v65, %v69
  %v71 = vadd.s32 %v70, 536870912
  %v72 = vshrl.u32 %v71, 30
  %v73 = vshll.u32 %v72, 30
  %v74 = vsub.s32 %v70, %v73
  %vm75 = vcmp.lt.s32.totalorder %v74, 0
  %v76 = vsub.s32 0, %v74
  %v77 = vsel %vm75, %v76, %v74
  %v78 = vclz %v77
  %v79 = vsub.s32 %v78, 2
  %vm80 = vcmp.gt.s32.totalorder 0, %v79
  %v81 = vsel %vm80, 0, %v79
  %v82 = vsub.s32 32, %v81
  %v83 = vshll.u32 %v74, %v81
  %v84 = vshrl.u32 %v66, %v82
  %v85 = vor.u32 %v83, %v84
  %v86 = vsub.s32 4294967266, %v81
  %v87 = vadd.s32 %v86, 127
  %v88 = vshll.u32 %v87, 23
  %v89 = vor.u32 4788187, %v88
  %v90 = vand.u32 2147483647, %v89
  %v92 = vcvt.s32.f32 %v85
  %v93 = vmul.f32 %v92, %v90
  %v94 = vxor.u32 %v93, 2147483648
  %v95 = vsel %vm12, %v94, %v93
  %v96 = vsub.s32 4, %v72
  %v97 = vsel %vm12, %v96, %v72
  %v98 = vsel %vm11, %v8, %v95
  %v99 = vsel %vm11, 0, %v97
  %v100 = vcosq.f32.pop %v98
  %v101 = vsinq.f32.pop %v98
  %vm102 = vweird.f32 %v8
  %v103 = vand.u32 %v99, 3
  %vm104 = vcmp.lt.s32.totalorder %v103, 2
  %vm105 = vcmp.eq.s32.totalorder %v103, 0
  %v106 = vxor.u32 %v101, 2147483648
  %v107 = vsel %vm105, %v100, %v106
  %vm108 = vcmp.eq.s32.totalorder %v103, 2
  %v109 = vxor.u32 %v100, 2147483648
  %v110 = vsel %vm108, %v109, %v101
  %v111 = vsel %vm104, %v107, %v110
  %v112 = vsel %vm102, nan, %v111
  %v113 = vand.u32 2147483647, %v9
  %vm114 = vcmp.le.f32.partialorder %v113, 0.7853982
  %vm115 = vcmp.lt.s32.totalorder %v9, 0
  %v116 = vand.u32 %v9, 2139095040
  %v117 = vshrl.u32 %v116, 23
  %v118 = vsub.s32 %v117, 127
  %v119 = vand.u32 2147483647, %v9
  %v120 = vand.u32 %v119, 8388607
  %v121 = vor.u32 %v120, 8388608
  %v122 = vsub.s32 0, %v121
  %v123 = vadd.s32 %v118, 1
  %vm124 = vcmp.gt.s32.totalorder %v123, 0
  %v125 = vsel %vm124, %v123, 0
  %v126 = vshrl.u32 %v125, 5
  %v127 = vand.u32 %v125, 31
  %v128 = vsub.s32 32, %v127
  %v129 = vshrl.u32 683565275, %v128
  %v130 = vshll.u32 683565275, %v127
  %v131 = vshrl.u32 2475754826, %v128
  %v132 = vor.u32 %v130, %v131
  %v133 = vshll.u32 2475754826, %v127
  %v134 = vshrl.u32 2131351028, %v128
  %v135 = vor.u32 %v133, %v134
  %v136 = vshll.u32 2131351028, %v127
  %v137 = vshrl.u32 2102212464, %v128
  %v138 = vor.u32 %v136, %v137
  %v139 = vshll.u32 2102212464, %v127
  %v140 = vshrl.u32 920167782, %v128
  %v141 = vor.u32 %v139, %v140
  %v142 = vshll.u32 920167782, %v127
  %v143 = vshrl.u32 1326507024, %v128
  %v144 = vor.u32 %v142, %v143
  %vm145 = vcmp.lt.s32.totalorder %v126, 1
  %vm146 = vcmp.lt.s32.totalorder %v126, 2
  %vm147 = vcmp.lt.s32.totalorder %v126, 3
  %vm148 = vcmp.lt.s32.totalorder %v126, 4
  %v149 = vsel %vm145, %v129, %v132
  %v150 = vsel %vm148, %v138, 2102212464
  %v151 = vsel %vm147, %v135, %v150
  %v152 = vsel %vm146, %v149, %v151
  %v153 = vsel %vm145, %v132, %v135
  %v154 = vsel %vm148, %v141, 920167782
  %v155 = vsel %vm147, %v138, %v154
  %v156 = vsel %vm146, %v153, %v155
  %v157 = vsel %vm145, %v135, %v138
  %v158 = vsel %vm148, %v144, 1326507024
  %v159 = vsel %vm147, %v141, %v158
  %v160 = vsel %vm146, %v157, %v159
  %v161 = vshll.u32 %v121, 8
  %v162 = vmul.u32.u64.compose %v161, %v160
  %v163 = vextract.low.u32 %v162
  %v164 = vextract.high.u32 %v162
  %v165 = vmul.u32.u64.compose %v161, %v156
  %v166 = vextract.low.u32 %v165
  %v167 = vextract.high.u32 %v165
  %v168 = vmul.u32 %v161, %v152
  %v169 = vadd.s32 %v164, %v166
  %vm170 = vc.u32 %v164, %v166
  %v171 = vadd.s32 %v167, 1
  %v172 = vsel %vm170, %v171, %v167
  %v173 = vadd.s32 %v168, %v172
  %v174 = vadd.s32 %v173, 536870912
  %v175 = vshrl.u32 %v174, 30
  %v176 = vshll.u32 %v175, 30
  %v177 = vsub.s32 %v173, %v176
  %vm178 = vcmp.lt.s32.totalorder %v177, 0
  %v179 = vsub.s32 0, %v177
  %v180 = vsel %vm178, %v179, %v177
  %v181 = vclz %v180
  %v182 = vsub.s32 %v181, 2
  %vm183 = vcmp.gt.s32.totalorder 0, %v182
  %v184 = vsel %vm183, 0, %v182
  %v185 = vsub.s32 32, %v184
  %v186 = vshll.u32 %v177, %v184
  %v187 = vshrl.u32 %v169, %v185
  %v188 = vor.u32 %v186, %v187
  %v189 = vsub.s32 4294967266, %v184
  %v190 = vadd.s32 %v189, 127
  %v191 = vshll.u32 %v190, 23
  %v192 = vor.u32 4788187, %v191
  %v193 = vand.u32 2147483647, %v192
  %v195 = vcvt.s32.f32 %v188
  %v196 = vmul.f32 %v195, %v193
  %v197 = vxor.u32 %v196, 2147483648
  %v198 = vsel %vm115, %v197, %v196
  %v199 = vsub.s32 4, %v175
  %v200 = vsel %vm115, %v199, %v175
  %v201 = vsel %vm114, %v9, %v198
  %v202 = vsel %vm114, 0, %v200
  %v203 = vcosq.f32.pop %v201
  %v204 = vsinq.f32.pop %v201
  %vm205 = vweird.f32 %v9
  %v206 = vand.u32 %v202, 3
  %vm207 = vcmp.lt.s32.totalorder %v206, 2
  %vm208 = vcmp.eq.s32.totalorder %v206, 0
  %v209 = vxor.u32 %v204, 2147483648
  %v210 = vsel %vm208, %v203, %v209
  %vm211 = vcmp.eq.s32.totalorder %v206, 2
  %v212 = vxor.u32 %v203, 2147483648
  %v213 = vsel %vm211, %v212, %v204
  %v214 = vsel %vm207, %v210, %v213
  %v215 = vsel %vm205, nan, %v214
  %216 = vst [vmem:[%s1] sm:$0xff] %v112
  %217 = vst [vmem:[%s1 + $0x8] sm:$0xff] %v215
  // Predicated region
  $region6: #{_lambda_.1} parent=0 // pred_check
    _
  $region7: #{_lambda_.1} parent=0 // pred_check_branch
    %219 = sbr.rel (0) target = $region9
  $region8: #{_lambda_.1} parent=0 // pred_region
    _
  $region9: #{_lambda_.1} parent=0 // pred_fallthru
    _
  // Predicated region
  $region10: #{_lambda_.1} parent=0 // pred_check
    _
  $region11: #{_lambda_.1} parent=0 // pred_check_branch
    %221 = sbr.rel (0) target = $region13
  $region12: #{_lambda_.1} parent=0 // pred_region
    _
  $region13: #{_lambda_.1} parent=0 // pred_fallthru
    _

</llo_original>
